<compile_context>
chip_gen: v5e
topology: v5e:2x2
jax: 0.10.0
libtpu: 0.0.40
codegen_flags: <defaults>
</compile_context>

<pallas_src>
import functools

import jax
import jax.numpy as jnp
from jax.experimental import pallas as pl
from jax.experimental.pallas import tpu as pltpu

BN_EPS = 1e-5


def _round_up(x, m):
    return (x + m - 1) // m * m


@functools.lru_cache(maxsize=1)
def _roll_like_jnp():
    """Detect pltpu.roll's shift convention once (defensive portability probe).

    Returns True if pltpu.roll(x, s, axis) == jnp.roll(x, s, axis), i.e.
    out[i] = x[(i - s) % n].
    """
    def probe(x_ref, o_ref):
        o_ref[...] = pltpu.roll(x_ref[...], 1, axis=1)

    x = jnp.arange(8 * 128, dtype=jnp.float32).reshape(8, 128)
    got = pl.pallas_call(
        probe, out_shape=jax.ShapeDtypeStruct((8, 128), jnp.float32))(x)
    if bool(jnp.array_equal(got, jnp.roll(x, 1, axis=1))):
        return True
    if bool(jnp.array_equal(got, jnp.roll(x, -1, axis=1))):
        return False
    raise RuntimeError("unexpected pltpu.roll semantics")


def _vmem_budget_bytes():
    """Generation-aware VMEM budget (128 MiB on v5e/v6e, 64 MiB/core on v7x)."""
    cap = 0
    try:
        cap = int(getattr(pltpu.get_tpu_info(), "vmem_capacity_bytes", 0))
    except Exception:
        cap = 0
    if cap <= 0:
        cap = 64 * 2 ** 20          # conservative fallback (v7x per-core size)
    return (3 * cap) // 4           # headroom for Pallas buffer rounding


def _make_residual_kernel(*, m_valid, cin_p, cout_p, lp, wop,
                          use_1x1conv, prebuilt_cols, roll_like_jnp):
    """Whole residual block in one kernel invocation (no grid)."""
    inv_m = 1.0 / float(m_valid)
    taps = [(kh, kw) for kh in range(3) for kw in range(3)]

    def shift_for(off):
        # We want band[p] = src[p + off]; with jnp.roll semantics that is
        # shift = -off (mod lp).  `roll_like_jnp` comes from the runtime probe.
        return ((-off) if roll_like_jnp else off) % lp

    def kernel(x_ref, mask_ref, w1_ref, g1_ref, be1_ref,
               w2_ref, g2_ref, be2_ref, w3_ref, b3_ref,
               out_ref, cols_ref):
        cd = cols_ref.dtype
        # Hoisted mask broadcast (JAX does not CSE broadcast_in_dim): one
        # (1, Lp) -> (cout_p, Lp) sublane broadcast reused by every `where`.
        maskc = pl.broadcast_to(mask_ref[...], (cout_p, lp)) > 0.5

        def batchnorm(z, g_ref, b_ref):
            # Training-mode BN over the m_valid interior positions (biased
            # variance), computed as E[z^2] - E[z]^2 so the two lane
            # reductions are independent (shorter XLU dependency chain).
            zm = jnp.where(maskc, z, 0.0)
            mean = jnp.sum(zm, axis=1, keepdims=True) * inv_m
            ex2 = jnp.sum(zm * zm, axis=1, keepdims=True) * inv_m
            var = ex2 - mean * mean
            scale = jax.lax.rsqrt(var + BN_EPS) * g_ref[...]
            return (z - mean) * scale + b_ref[...]

        # ---- conv1 (3x3, stride folded into layout) -> BN1 -> ReLU ----------
        # conv1/conv2 biases are dropped on purpose: training-mode BN subtracts
        # the batch mean, which cancels them exactly.
        if prebuilt_cols:                  # stride > 1: im2col built in wrapper
            cols1 = x_ref[...]                                   # (9*cin_p, Lp)
            skip_src = x_ref[4 * cin_p:5 * cin_p, :]             # centre tap
        else:                              # stride == 1: 9 XLU lane-rolls of x
            x_slab = x_ref[...]                                  # (cin_p, Lp) f32
            for t, (kh, kw) in enumerate(taps):
                sh = shift_for((kh - 1) * wop + (kw - 1))
                band = x_slab if sh == 0 else pltpu.roll(x_slab, sh, axis=1)
                cols_ref[t * cin_p:(t + 1) * cin_p, :] = band.astype(cd)
            cols1 = cols_ref[0:9 * cin_p, :]
            skip_src = x_slab
        y = jnp.dot(w1_ref[...], cols1, preferred_element_type=jnp.float32)
        y = batchnorm(y, g1_ref, be1_ref)
        # ReLU; also force exact zeros on halo/pad lanes -- those lanes are
        # conv2's zero padding.
        y = jnp.where(maskc, jnp.maximum(y, 0.0), 0.0)

        # ---- conv2 (3x3, stride 1) -> BN2 -----------------------------------
        # Each tap band is a full-width, 128-aligned store of an XLU-rolled
        # copy of y (no masked vst, no uninitialized guard columns).
        # TODO(synk): for production Cout (>=64) switch to 9 accumulating
        # K=Cout matmuls over rolled views of y (drops 8 of 9 band stores and
        # ~9x of this scratch; needed to fit v7x's 64 MiB VMEM at real sizes).
        for t, (kh, kw) in enumerate(taps):
            sh = shift_for((kh - 1) * wop + (kw - 1))
            band = y if sh == 0 else pltpu.roll(y, sh, axis=1)
            cols_ref[t * cout_p:(t + 1) * cout_p, :] = band.astype(cd)
        z = jnp.dot(w2_ref[...], cols_ref[0:9 * cout_p, :],
                    preferred_element_type=jnp.float32)
        z = batchnorm(z, g2_ref, be2_ref)

        # ---- skip path + residual add + final ReLU --------------------------
        if use_1x1conv:
            skip = jnp.dot(w3_ref[...], skip_src.astype(cd),
                           preferred_element_type=jnp.float32) + b3_ref[...]
        else:
            skip = skip_src.astype(jnp.float32)   # identity (Cin==Cout, s==1)
        out_ref[...] = jnp.maximum(z + skip, 0.0)

    return kernel


def residual_forward(x_nchw, params, *, stride=1, use_1x1conv=False,
                     matmul_dtype=jnp.bfloat16):
    """PyTorch-faithful Residual.forward (training-mode BN). NCHW in / out.

    matmul_dtype: dtype fed to the MXU (weights + im2col bands).  bf16 hits the
    v6e/v7x MXU fast path and halves scratch bytes; BN / accumulation stay f32.
    """
    w1, b1, g1, be1, w2, b2, g2, be2, w3, b3 = params
    del b1, b2  # training-mode BN cancels conv biases exactly

    x = jnp.asarray(x_nchw, jnp.float32)
    N, Cin, H, W = x.shape
    Cout = w1.shape[-1]
    s = int(stride)
    Ho = (H - 1) // s + 1
    Wo = (W - 1) // s + 1
    if not use_1x1conv and not (s == 1 and Cin == Cout):
        raise ValueError(
            "identity skip requires stride == 1 and in_channels == out_channels")

    cd = jnp.dtype(matmul_dtype)
    # Channel padding: 8 sublanes for 32-bit, 16 for bf16 so every im2col band
    # store starts on a full packed-sublane tile.
    chan_align = 8 * max(1, 4 // cd.itemsize)
    cin_p = _round_up(Cin, chan_align)
    cout_p = _round_up(Cout, chan_align)
    Hop, Wop = Ho + 2, Wo + 2            # output grid with a 1-pixel halo ring
    L = N * Hop * Wop
    Lp = _round_up(L, 128)               # lane-dense: unmasked stores, clean MXU N-tiling

    # channel-first, channel-padded, spatially padded input: (cin_p, N, H+2, W+2)
    x_cn = jnp.pad(jnp.transpose(x, (1, 0, 2, 3)),
                   ((0, cin_p - Cin), (0, 0), (1, 1), (1, 1)))

    if s == 1:
        # Flat padded image; the kernel builds all 9 im2col bands via XLU rolls.
        # Kept f32 so the rolls run on 32-bit lanes; bands are cast to
        # `matmul_dtype` as they are stored into the scratch.
        x_in = jnp.pad(x_cn.reshape(cin_p, L), ((0, 0), (0, Lp - L)))
        prebuilt = False
    else:
        # stride > 1: conv1's im2col is built on the padded output grid in XLA.
        # TODO(synk): on v5e this re-reads ~9x the input from HBM; build the
        # strided taps in-kernel for production sizes.
        bands = []
        for kh in range(3):
            for kw in range(3):
                tv = jax.lax.slice(
                    x_cn, (0, 0, kh, kw),
                    (cin_p, N, kh + (Ho - 1) * s + 1, kw + (Wo - 1) * s + 1),
                    (1, 1, s, s))
                tv = jnp.pad(tv, ((0, 0), (0, 0), (1, 1), (1, 1)))
                bands.append(tv.reshape(cin_p, L))
        x_in = jnp.pad(jnp.concatenate(bands, axis=0),
                       ((0, 0), (0, Lp - L))).astype(cd)
        prebuilt = True

    # 1 on the N*Ho*Wo interior positions, 0 on the halo ring and lane padding.
    mask = jnp.pad(
        jnp.pad(jnp.ones((N, Ho, Wo), jnp.float32),
                ((0, 0), (1, 1), (1, 1))).reshape(1, L),
        ((0, 0), (0, Lp - L)))

    def conv_w(w, ci_p, co_p):           # HWIO -> (co_p, 9*ci_p), tap = kh*3+kw
        w = jnp.pad(jnp.asarray(w, jnp.float32),
                    ((0, 0), (0, 0), (0, ci_p - w.shape[2]), (0, co_p - w.shape[3])))
        return jnp.transpose(w, (3, 0, 1, 2)).reshape(co_p, 9 * ci_p).astype(cd)

    def colvec(v, c_p):
        v = jnp.asarray(v, jnp.float32)
        return jnp.pad(v, (0, c_p - v.shape[0])).reshape(c_p, 1)

    w1k = conv_w(w1, cin_p, cout_p)
    w2k = conv_w(w2, cout_p, cout_p)
    if use_1x1conv:
        w3k = jnp.pad(jnp.asarray(w3, jnp.float32)[0, 0],
                      ((0, cin_p - Cin), (0, cout_p - Cout))).T.astype(cd)
        b3k = colvec(b3, cout_p)
    else:
        w3k = jnp.zeros((cout_p, cin_p), cd)
        b3k = jnp.zeros((cout_p, 1), jnp.float32)

    scratch_rows = 9 * max(cin_p, cout_p)

    inputs = (x_in, mask,
              w1k, colvec(g1, cout_p), colvec(be1, cout_p),
              w2k, colvec(g2, cout_p), colvec(be2, cout_p),
              w3k, b3k)

    est_bytes = (sum(int(a.size) * a.dtype.itemsize for a in inputs)
                 + cout_p * Lp * 4                        # output slab (f32)
                 + scratch_rows * Lp * cd.itemsize)       # im2col scratch
    budget = _vmem_budget_bytes()
    if est_bytes > budget:
        # TODO(synk): tiled/gridded variant with two-pass BN for larger shapes.
        raise ValueError(
            f"single-shot residual working set ~{est_bytes / 2**20:.1f} MiB "
            f"exceeds the VMEM budget {budget / 2**20:.1f} MiB; a gridded "
            "variant is required for this shape.")

    kernel = _make_residual_kernel(
        m_valid=N * Ho * Wo, cin_p=cin_p, cout_p=cout_p, lp=Lp, wop=Wop,
        use_1x1conv=use_1x1conv, prebuilt_cols=prebuilt,
        roll_like_jnp=_roll_like_jnp())

    vmem = pl.BlockSpec(memory_space=pltpu.MemorySpace.VMEM)
    out = pl.pallas_call(
        kernel,
        out_shape=jax.ShapeDtypeStruct((cout_p, Lp), jnp.float32),
        in_specs=[vmem] * len(inputs),
        out_specs=vmem,
        scratch_shapes=[pltpu.VMEM((scratch_rows, Lp), cd)],
        compiler_params=pltpu.CompilerParams(vmem_limit_bytes=int(budget)),
    )(*inputs)

    out = out[:, :L].reshape(cout_p, N, Hop, Wop)[:Cout, :, 1:Ho + 1, 1:Wo + 1]
    return jnp.transpose(out, (1, 0, 2, 3))   # back to NCHW


def residual_ref(x_nchw, params, *, stride=1, use_1x1conv=False):
    """Pure-JAX reference (matches PyTorch training-mode forward)."""
    w1, b1, g1, be1, w2, b2, g2, be2, w3, b3 = params
    x = jnp.transpose(x_nchw, (0, 2, 3, 1)).astype(jnp.float32)

    def conv(x, w, b, s, pad):
        y = jax.lax.conv_general_dilated(
            x, w, window_strides=(s, s), padding=((pad, pad), (pad, pad)),
            dimension_numbers=("NHWC", "HWIO", "NHWC"),
            precision=jax.lax.Precision.HIGHEST)
        return y + b

    def bn(y, g, be):
        mean = jnp.mean(y, axis=(0, 1, 2), keepdims=True)
        var = jnp.mean((y - mean) ** 2, axis=(0, 1, 2), keepdims=True)
        return (y - mean) * jax.lax.rsqrt(var + BN_EPS) * g + be

    y = jax.nn.relu(bn(conv(x, w1, b1, stride, 1), g1, be1))
    y = bn(conv(y, w2, b2, 1, 1), g2, be2)
    skip = conv(x, w3, b3, stride, 0) if use_1x1conv else x
    return jnp.transpose(jax.nn.relu(y + skip), (0, 3, 1, 2))


if __name__ == "__main__":
    # Residual(in_channels=4, out_channels=8, use_1x1conv=True, strides=1)
    N, Cin, H, W = 2, 4, 16, 16
    Cout = 8

    key = jax.random.PRNGKey(0)
    ks = jax.random.split(key, 11)
    x = jax.random.normal(ks[0], (N, Cin, H, W), jnp.float32)  # NCHW like PyTorch

    # Deterministic synthetic parameters (shapes from nn.Conv2d / nn.BatchNorm2d).
    w1 = 0.1 * jax.random.normal(ks[1], (3, 3, Cin, Cout), jnp.float32)   # conv1 (HWIO)
    b1 = 0.1 * jax.random.normal(ks[2], (Cout,), jnp.float32)
    w2 = 0.1 * jax.random.normal(ks[3], (3, 3, Cout, Cout), jnp.float32)  # conv2
    b2 = 0.1 * jax.random.normal(ks[4], (Cout,), jnp.float32)
    w3 = 0.1 * jax.random.normal(ks[5], (1, 1, Cin, Cout), jnp.float32)   # conv3 (1x1)
    b3 = 0.1 * jax.random.normal(ks[6], (Cout,), jnp.float32)
    g1 = 1.0 + 0.1 * jax.random.normal(ks[7], (Cout,), jnp.float32)       # bn1 gamma
    be1 = 0.1 * jax.random.normal(ks[8], (Cout,), jnp.float32)            # bn1 beta
    g2 = 1.0 + 0.1 * jax.random.normal(ks[9], (Cout,), jnp.float32)       # bn2 gamma
    be2 = 0.1 * jax.random.normal(ks[10], (Cout,), jnp.float32)           # bn2 beta
    params = (w1, b1, g1, be1, w2, b2, g2, be2, w3, b3)

    # (stride, use_1x1conv, matmul_dtype, tolerance).  bf16 tolerance reflects
    # operand quantization (~0.4% relative per conv) vs the HIGHEST-precision ref.
    cases = [
        (1, True, jnp.float32, 2e-2),    # f32 MXU path, stride 1
        (1, True, jnp.bfloat16, 8e-2),   # bf16 MXU fast path (BN still f32)
        (2, True, jnp.float32, 2e-2),    # strided path (prebuilt im2col)
    ]
    for stride, use_1x1, mdt, tol in cases:
        out = residual_forward(x, params, stride=stride, use_1x1conv=use_1x1,
                               matmul_dtype=mdt)
        out = jax.block_until_ready(out)
        ref = residual_ref(x, params, stride=stride, use_1x1conv=use_1x1)
        assert out.shape == ref.shape == (N, Cout, H // stride, W // stride)
        max_err = float(jnp.max(jnp.abs(out - ref)))
        assert max_err < tol, (
            f"stride={stride} dtype={jnp.dtype(mdt).name}: "
            f"max abs error too large: {max_err}")
    print("KERNEL_OK")
</pallas_src>

<mosaic_0001>
module attributes {stable_mosaic.version = 11 : i64} {
  func.func @probe(%arg0: memref<8x128xf32, #tpu.memory_space<vmem>>, %arg1: memref<8x128xf32, #tpu.memory_space<vmem>>) attributes {dimension_semantics = [], scalar_prefetch = 0 : i64, scratch_operands = 0 : i64, tpu.core_type = #tpu.core_type<tc>} {
    %c0 = arith.constant 0 : index
    %c0_0 = arith.constant 0 : index
    %0 = vector.load %arg0[%c0, %c0_0] : memref<8x128xf32, #tpu.memory_space<vmem>>, vector<8x128xf32>
    %c1_i32 = arith.constant 1 : i32
    %1 = tpu.dynamic_rotate %0 by %c1_i32 dim 1 : vector<8x128xf32>, i32 -> vector<8x128xf32>
    %c0_1 = arith.constant 0 : index
    %c0_2 = arith.constant 0 : index
    %2 = vector.load %arg1[%c0_1, %c0_2] : memref<8x128xf32, #tpu.memory_space<vmem>>, vector<8x128xf32>
    tpu.vector_store %arg1[%c0_1, %c0_2], %1 {strides = array<i32>} : memref<8x128xf32, #tpu.memory_space<vmem>>, vector<8x128xf32>,
    return
  }
}

</mosaic_0001>

<llo_original>
// kernel: tpu_custom_call.1
$region0: #{tpu_custom_call.1}
  #allocation0 [shape = 'u32[]', space=smem, size = 0x4, offset = 0x4, fixed_abs, tag = 'smem constant byte address 0x4 - core index']
  #allocation1 [shape = 'u32[72,128]{1,0:T(1,128)}', space=vmem, size = 0x9000, scoped, tag = 'internal scratch']
  %s0 = inlined_call_operand.hbm [shape: f32[8,128], index: 0, kind: input, shape index: {}]
  %s1 = inlined_call_operand.hbm [shape: f32[8,128], index: 1, kind: output, shape index: {}]
  %s2 = sld [smem:[#allocation0]]
  $region18: #{tpu_custom_call.1} parent=0
    _
  %s4 = ssub.s32 1, %s2
  %s5 = scalar_select 0, %s4, %s2
  $region1: #{tpu_custom_call.1} parent=0
    #allocation2 [shape = 'u8[4096]{0}', space=vmem, size = 0x1000, scoped, tag = 'input window, operand 0, single buffered']
    #allocation3 [shape = 's32[1]{0}', space=sflag, size = 0x4, scoped, tag = 'scoped memory for tpu_custom_call.1']
    #allocation4 [shape = 's32[1]{0}', space=sflag, size = 0x4, scoped, tag = 'scoped memory for tpu_custom_call.1']
    #allocation5 [shape = 'u8[4096]{0}', space=vmem, size = 0x1000, scoped, tag = 'output window, operand 0, single buffered']
    %6 = vsyncpa [#allocation3], 0
    %7 = vsyncpa [#allocation4], 0
    // Predicated region
    $region2: #{tpu_custom_call.1} parent=1 // pred_check
      _
    $region3: #{tpu_custom_call.1} parent=1 // pred_check_branch
      %9 = sbr.rel (0) target = $region5
    $region4: #{tpu_custom_call.1} parent=1 // pred_region
      %11 = vsyncadd [#allocation3], 0
      %s13 = sshll.u32 %s0, 4
      %s14 = int_to_ptr.hbm [resolvable:$true] %s13
      %s15 = sshll.u32 [#allocation2], 4
      %s16 = int_to_ptr.vmem [resolvable:$true] %s15
      %18 = dma.hbm_to_vmem [thread:$0]  %s14, 128, %s16, [#allocation3]
    $region5: #{tpu_custom_call.1} parent=1 // pred_fallthru
      _
    // Predicated region
    $region6: #{tpu_custom_call.1} parent=1 // pred_check
      _
    $region7: #{tpu_custom_call.1} parent=1 // pred_check_branch
      %20 = sbr.rel (0) target = $region9
    $region8: #{tpu_custom_call.1} parent=1 // pred_region
      %22 = dma.done [#allocation3], 128
    $region9: #{tpu_custom_call.1} parent=1 // pred_fallthru
      _
    %v23 = vld [vmem:[#allocation2] sm:$0xff]
    %24 = vrot.lane.b32.xlu0 %v23, 1
    %v25 = vpop.permute.xlu0 %24
    %26 = vst [vmem:[#allocation5] sm:$0xff] %v25
    // Predicated region
    $region10: #{tpu_custom_call.1} parent=1 // pred_check
      _
    $region11: #{tpu_custom_call.1} parent=1 // pred_check_branch
      %28 = sbr.rel (0) target = $region13
    $region12: #{tpu_custom_call.1} parent=1 // pred_region
      %30 = vsyncadd [#allocation4], 0
      %s32 = sshll.u32 [#allocation5], 4
      %s33 = int_to_ptr.vmem [resolvable:$true] %s32
      %s34 = sshll.u32 %s1, 4
      %s35 = int_to_ptr.hbm [resolvable:$true] %s34
      %37 = dma.vmem_to_hbm [thread:$0]  %s33, 128, %s35, [#allocation4]
    $region13: #{tpu_custom_call.1} parent=1 // pred_fallthru
      _
    // Predicated region
    $region14: #{tpu_custom_call.1} parent=1 // pred_check
      _
    $region15: #{tpu_custom_call.1} parent=1 // pred_check_branch
      %39 = sbr.rel (0) target = $region17
    $region16: #{tpu_custom_call.1} parent=1 // pred_region
      %41 = dma.done [#allocation4], 128
    $region17: #{tpu_custom_call.1} parent=1 // pred_fallthru
      _
    %42 = vsyncpa [#allocation3], 1
    %43 = vsyncpa [#allocation4], 1

</llo_original>
